<compile_context>
chip_gen: v5e
topology: v5e:2x2
jax: 0.10.0
libtpu: 0.0.40
codegen_flags: <defaults>
</compile_context>

<pallas_src>
import math

import jax
import jax.numpy as jnp
from jax import lax
from jax.experimental import pallas as pl
from jax.experimental.pallas import tpu as pltpu


# ---------------------------------------------------------------------------
# Kernel
# ---------------------------------------------------------------------------
def _make_kernel(scale, acc_transposed, hoist_kt):
    """Builds the kernel body.

    acc_transposed: keep the o2 accumulator in [D, Lk] layout (used when Lk > D).
    hoist_kt:       materialize K^T once per batch into a VMEM scratch (used
                    when the query-tile axis actually iterates, n_q > 1).
    """

    def _body(q_ref, k_ref, v_ref, out_ref, w_ref, kt_ref, acc_ref):
        qi = pl.program_id(1)
        last_q = pl.num_programs(1) - 1

        # Fold the 1/sqrt(d_model) scale into the (small) Q tile rather than
        # the [TQ, Lk] f32 scores.
        q = q_ref[...] * scale                     # [TQ, D] (native input dtype)
        v = v_ref[...]                             # [Lk, D]

        if kt_ref is not None:
            # K is resident across the qi axis: transpose it once per batch so
            # every step feeds the MXU an untransposed [D, Lk] RHS.
            @pl.when(qi == 0)
            def _hoist_kt():
                kt_ref[...] = k_ref[...].T         # [D, Lk]

            scores = jnp.dot(q, kt_ref[...],
                             preferred_element_type=jnp.float32)      # [TQ, Lk]
        else:
            # Single query tile per batch: nothing to amortize, use the
            # contraction-spec form directly.
            scores = lax.dot_general(
                q, k_ref[...], (((1,), (1,)), ((), ())),
                preferred_element_type=jnp.float32)                    # [TQ, Lk]

        # Numerically stable softmax over the key axis (f32 intermediates).
        m = jnp.max(scores, axis=-1, keepdims=True)
        e = jnp.exp(scores - m)
        denom = jnp.sum(e, axis=-1, keepdims=True)
        # EUP approximate reciprocal + one Newton-Raphson step on the tiny
        # [TQ, 1] denominator: near-exact weights for the HBM output while the
        # reciprocal itself stays on the (otherwise idle) EUP slot.
        inv = pl.reciprocal(denom, approx=True)
        inv = inv * (2.0 - denom * inv)
        weights = e * inv                                              # [TQ, Lk] f32

        p = weights.astype(v.dtype)

        # o1 = W @ V -> [TQ, D]
        o1 = lax.dot_general(p, v, (((1,), (0,)), ((), ())),
                             preferred_element_type=jnp.float32)
        o1c = o1.astype(v.dtype)

        # o2 partial = W^T @ o1, accumulated across query tiles.
        if acc_transposed:
            # [D, Lk] layout: the per-step operand transpose is on the smaller
            # [TQ, D] matrix (win when Lk >> D); undone once per batch below.
            part = lax.dot_general(o1c, p, (((0,), (0,)), ((), ())),
                                   preferred_element_type=jnp.float32)  # [D, Lk]
        else:
            part = lax.dot_general(p, o1c, (((0,), (0,)), ((), ())),
                                   preferred_element_type=jnp.float32)  # [Lk, D]

        # Merge init with the first accumulate (no separate zero-store pass).
        @pl.when(qi == 0)
        def _first():
            acc_ref[...] = part

        @pl.when(qi != 0)
        def _rest():
            acc_ref[...] += part

        # Weights tile written once per grid step; reuse the already-cast tile
        # when the output dtype matches (no redundant full-tile cast).
        if p.dtype == w_ref.dtype:
            w_ref[...] = p
        else:
            w_ref[...] = weights.astype(w_ref.dtype)

        @pl.when(qi == last_q)
        def _finalize():
            acc = acc_ref[...]
            if acc_transposed:
                acc = acc.T                       # one transpose per batch
            out_ref[...] = acc.astype(out_ref.dtype)

    if hoist_kt:
        def kernel(q_ref, k_ref, v_ref, out_ref, w_ref, kt_ref, acc_ref):
            _body(q_ref, k_ref, v_ref, out_ref, w_ref, kt_ref, acc_ref)
    else:
        def kernel(q_ref, k_ref, v_ref, out_ref, w_ref, acc_ref):
            _body(q_ref, k_ref, v_ref, out_ref, w_ref, None, acc_ref)

    return kernel


# ---------------------------------------------------------------------------
# VMEM / tiling plumbing (generation-aware)
# ---------------------------------------------------------------------------
def _vmem_capacity_bytes():
    """Physical VMEM per core; conservative 64 MiB (v7x) fallback."""
    try:
        cap = int(getattr(pltpu.get_tpu_info(), "vmem_capacity_bytes", 0))
        if cap > 0:
            return cap
    except Exception:
        pass
    return 64 * 1024 * 1024


def _resident_bytes(Lk, D, in_bytes, hoist_kt):
    # TODO(synk): K/V never change within a batch; pipeline_mode=pl.Buffered(1)
    # on their BlockSpecs would drop the 2x double-buffer factor below and free
    # ~2*Lk*D*in_bytes of VMEM on v7x (kept default-buffered here for safety).
    return (4 * Lk * D * in_bytes            # K and V, double-buffered
            + (Lk * D * in_bytes if hoist_kt else 0)   # K^T scratch
            + Lk * D * 4                     # o2 accumulator scratch (f32)
            + 2 * Lk * D * in_bytes)         # resident output block


def _per_step_bytes(tq, Lk, D, in_bytes, w_bytes):
    return (4 * tq * Lk * 4                  # f32 scores/exp/weights (+slack)
            + 2 * tq * Lk * w_bytes          # weights output tile, double-buffered
            + 2 * tq * D * in_bytes)         # Q tile, double-buffered


def _pick_tq(Lq, Lk, D, in_bytes, w_bytes, budget, resident):
    """Largest MXU-friendly query tile whose working set fits the VMEM budget.

    Sub-32-bit dtypes pack two rows per sublane, so tiles below 16 rows are
    skipped for them; candidates are descending powers of two (multiples of
    128/256 are preferred automatically when Lq allows)."""
    sublane_min = 8 if in_bytes >= 4 else 16
    preferred = (1024, 512, 256, 128, 64, 32, 16, 8)
    candidates = [c for c in preferred if Lq % c == 0 and c >= sublane_min]
    if not candidates:
        candidates = [Lq]
    for tq in candidates:
        if resident + _per_step_bytes(tq, Lk, D, in_bytes, w_bytes) <= budget:
            return tq
    return candidates[-1]


# ---------------------------------------------------------------------------
# Wrapper
# ---------------------------------------------------------------------------
def attention_layer_scaled_dot_product(query, key, value, mask=None,
                                       weights_dtype=None):
    """Pallas implementation of AttentionLayer.forward ('scaled_dot_product').

    Returns (output [B, Lk, D], attention_weights [B, Lq, Lk]).
    `weights_dtype` may be set to jnp.bfloat16 to halve the attention-weights
    HBM writeback (the dominant traffic on v5e for large Lq*Lk)."""
    if mask is not None:
        # TODO(synk): PyTorch masked_fill with a [B, seq_len] mask against
        # [B, Lq, Lk] scores relies on broadcasting only well-defined when
        # B == Lq; not reproduced here (default mask=None path).
        raise NotImplementedError("mask is not supported in this kernel")

    B, Lq, D = query.shape
    Bk, Lk, Dk = key.shape
    assert (B, D) == (Bk, Dk) and value.shape == key.shape
    assert query.dtype == key.dtype == value.dtype

    in_dtype = query.dtype
    in_bytes = jnp.dtype(in_dtype).itemsize
    w_dtype = jnp.dtype(weights_dtype) if weights_dtype is not None else jnp.dtype(in_dtype)
    w_bytes = w_dtype.itemsize

    scale = 1.0 / math.sqrt(float(D))
    acc_transposed = Lk > D                  # keep acc in [D, Lk] when Lk >> D

    # Generation-aware VMEM budgeting (≈45 MiB on 64 MiB v7x, ≈90 MiB on
    # 128 MiB v5e/v6e parts); hard cap 8 MiB below physical VMEM.
    vmem_physical = _vmem_capacity_bytes()
    budget = vmem_physical * 7 // 10
    vmem_cap = vmem_physical - 8 * 1024 * 1024

    # First pass assumes the K^T hoist is active (worst-case VMEM), then
    # finalize once n_q is known.
    resident = _resident_bytes(Lk, D, in_bytes, hoist_kt=True)
    TQ = _pick_tq(Lq, Lk, D, in_bytes, w_bytes, budget, resident)
    n_q = max(1, Lq // TQ) if Lq % TQ == 0 else 1
    if Lq % TQ != 0:       # fallback candidate was Lq itself
        TQ, n_q = Lq, 1
    hoist_kt = n_q > 1     # only worth a scratch when the transpose is amortized

    resident = _resident_bytes(Lk, D, in_bytes, hoist_kt)
    vmem_need = resident + _per_step_bytes(TQ, Lk, D, in_bytes, w_bytes)
    if vmem_need > vmem_cap:
        # TODO(synk): add an Lk grid axis (flash-style K/V streaming with
        # online rescale + per-(qi, ki) weights tiles) for sequences whose
        # resident K/V/out/acc working set exceeds VMEM.
        raise NotImplementedError(
            "resident K/V working set does not fit VMEM; Lk streaming not implemented")

    vmem_limit = min(max(vmem_need * 3 // 2, 32 * 1024 * 1024), vmem_cap)

    cost = pl.CostEstimate(
        flops=6 * B * Lq * Lk * D,                     # three big matmuls
        transcendentals=B * Lq * Lk,                   # exp
        bytes_accessed=(query.size + key.size + value.size) * in_bytes
                        + B * Lq * Lk * w_bytes + B * Lk * D * in_bytes,
    )

    out_shapes = (
        jax.ShapeDtypeStruct((B, Lk, D), in_dtype),    # output = W^T @ (W @ V)
        jax.ShapeDtypeStruct((B, Lq, Lk), w_dtype),    # attention_weights
    )

    acc_shape = (D, Lk) if acc_transposed else (Lk, D)
    scratch_shapes = []
    if hoist_kt:
        scratch_shapes.append(pltpu.VMEM((D, Lk), key.dtype))   # hoisted K^T
    scratch_shapes.append(pltpu.VMEM(acc_shape, jnp.float32))   # o2 accumulator

    kernel = _make_kernel(scale, acc_transposed, hoist_kt)

    # TODO(synk): for B == 1 on v7x the "parallel" batch axis leaves one of the
    # two TensorCores idle; a core-parallel split of the qi axis with a final
    # cross-core reduce of the o2 accumulator (VMEM_SHARED/CMEM) would recover
    # up to 2x there.
    # TODO(synk): for D, Lk << 128 the tiles underfill lanes; folding several
    # batch elements into the lane dimension would make the stores lane-dense.
    out, weights = pl.pallas_call(
        kernel,
        out_shape=out_shapes,
        grid_spec=pltpu.PrefetchScalarGridSpec(
            num_scalar_prefetch=0,
            grid=(B, n_q),
            in_specs=[
                pl.BlockSpec((None, TQ, D), lambda b, qi: (b, qi, 0)),   # Q (tiled)
                pl.BlockSpec((None, Lk, D), lambda b, qi: (b, 0, 0)),    # K (resident)
                pl.BlockSpec((None, Lk, D), lambda b, qi: (b, 0, 0)),    # V (resident)
            ],
            out_specs=[
                pl.BlockSpec((None, Lk, D), lambda b, qi: (b, 0, 0)),    # output (resident)
                pl.BlockSpec((None, TQ, Lk), lambda b, qi: (b, qi, 0)),  # weights
            ],
            scratch_shapes=scratch_shapes,
        ),
        compiler_params=pltpu.CompilerParams(
            dimension_semantics=("parallel", "arbitrary"),
            vmem_limit_bytes=int(vmem_limit),
        ),
        cost_estimate=cost,
    )(query, key, value)
    return out, weights


# ---------------------------------------------------------------------------
# Pure-JAX reference (mirrors the PyTorch module)
# ---------------------------------------------------------------------------
def _reference(query, key, value):
    d_model = query.shape[-1]
    scores = jnp.einsum("bqd,bkd->bqk", query, key) / math.sqrt(float(d_model))
    w = jax.nn.softmax(scores, axis=-1)
    o1 = jnp.einsum("bqk,bkd->bqd", w, value)
    o2 = jnp.einsum("bqk,bqd->bkd", w, o1)     # W^T @ (W @ V)
    return o2, w


if __name__ == "__main__":
    # Small shapes consistent with the module's forward signature.
    B, Lq, Lk, D = 2, 8, 8, 32

    key0 = jax.random.PRNGKey(0)
    kq, kk, kv = jax.random.split(key0, 3)
    query = jax.random.normal(kq, (B, Lq, D), dtype=jnp.float32)
    key_t = jax.random.normal(kk, (B, Lk, D), dtype=jnp.float32)
    value = jax.random.normal(kv, (B, Lk, D), dtype=jnp.float32)

    out, attn_w = attention_layer_scaled_dot_product(query, key_t, value)
    out = jax.block_until_ready(out)
    attn_w = jax.block_until_ready(attn_w)

    ref_out, ref_w = _reference(query, key_t, value)
    assert jnp.allclose(attn_w, ref_w, atol=1e-3, rtol=1e-3), "weights mismatch"
    assert jnp.allclose(out, ref_out, atol=1e-3, rtol=1e-3), "output mismatch"

    print("KERNEL_OK")
</pallas_src>

<mosaic_0001>
module attributes {stable_mosaic.version = 11 : i64} {
  func.func @kernel(%arg0: i32, %arg1: i32, %arg2: memref<1x8x32xf32, #tpu.memory_space<vmem>>, %arg3: memref<1x8x32xf32, #tpu.memory_space<vmem>>, %arg4: memref<1x8x32xf32, #tpu.memory_space<vmem>>, %arg5: memref<1x8x32xf32, #tpu.memory_space<vmem>>, %arg6: memref<1x8x8xf32, #tpu.memory_space<vmem>>, %arg7: memref<8x32xf32, #tpu.memory_space<vmem>>) attributes {dimension_semantics = [#tpu.dimension_semantics<parallel>, #tpu.dimension_semantics<arbitrary>], iteration_bounds = array<i64: 2, 1>, scalar_prefetch = 0 : i64, scratch_operands = 1 : i64, tpu.core_type = #tpu.core_type<tc>, window_params = [{transform_indices = @transform_0, window_bounds = array<i64: 1, 8, 32>}, {transform_indices = @transform_1, window_bounds = array<i64: 1, 8, 32>}, {transform_indices = @transform_2, window_bounds = array<i64: 1, 8, 32>}, {transform_indices = @transform_3, window_bounds = array<i64: 1, 8, 32>}, {transform_indices = @transform_4, window_bounds = array<i64: 1, 8, 8>}]} {
    %c0 = arith.constant 0 : index
    %c0_0 = arith.constant 0 : index
    %c0_1 = arith.constant 0 : index
    %0 = vector.load %arg2[%c0, %c0_0, %c0_1] : memref<1x8x32xf32, #tpu.memory_space<vmem>>, vector<1x8x32xf32>
    %1 = vector.shape_cast %0 : vector<1x8x32xf32> to vector<8x32xf32>
    %cst = arith.constant 0.176776692 : f32
    %2 = vector.broadcast %cst : f32 to vector<8x32xf32>
    %3 = arith.mulf %1, %2 : vector<8x32xf32>
    %c0_2 = arith.constant 0 : index
    %c0_3 = arith.constant 0 : index
    %c0_4 = arith.constant 0 : index
    %4 = vector.load %arg4[%c0_2, %c0_3, %c0_4] : memref<1x8x32xf32, #tpu.memory_space<vmem>>, vector<1x8x32xf32>
    %5 = vector.shape_cast %4 : vector<1x8x32xf32> to vector<8x32xf32>
    %c0_5 = arith.constant 0 : index
    %c0_6 = arith.constant 0 : index
    %c0_7 = arith.constant 0 : index
    %6 = vector.load %arg3[%c0_5, %c0_6, %c0_7] : memref<1x8x32xf32, #tpu.memory_space<vmem>>, vector<1x8x32xf32>
    %7 = vector.shape_cast %6 : vector<1x8x32xf32> to vector<8x32xf32>
    %cst_8 = arith.constant dense<0.000000e+00> : vector<8x8xf32>
    %8 = tpu.matmul %3, %7, %cst_8 {dimension_numbers = #tpu.dot_dimension_numbers<[1], [1], [0], [0], [0, 0, 1, 0], [], []>} : vector<8x32xf32>, vector<8x32xf32>, vector<8x8xf32> -> vector<8x8xf32>
    %cst_9 = arith.constant dense<0xFF800000> : vector<8xf32>
    %9 = vector.multi_reduction <maximumf>, %8, %cst_9 [1] : vector<8x8xf32> to vector<8xf32>
    %10 = vector.shape_cast %9 : vector<8xf32> to vector<8x1xf32>
    %11 = vector.broadcast %10 : vector<8x1xf32> to vector<8x8xf32>
    %12 = arith.subf %8, %11 : vector<8x8xf32>
    %13 = math.exp %12 : vector<8x8xf32>
    %cst_10 = arith.constant dense<0.000000e+00> : vector<8xf32>
    %14 = vector.multi_reduction <add>, %13, %cst_10 [1] : vector<8x8xf32> to vector<8xf32>
    %15 = vector.shape_cast %14 : vector<8xf32> to vector<8x1xf32>
    %16 = tpu.reciprocal %15 {approx = true} : vector<8x1xf32> -> vector<8x1xf32>
    %17 = arith.mulf %15, %16 : vector<8x1xf32>
    %cst_11 = arith.constant 2.000000e+00 : f32
    %18 = vector.broadcast %cst_11 : f32 to vector<8x1xf32>
    %19 = arith.subf %18, %17 : vector<8x1xf32>
    %20 = arith.mulf %16, %19 : vector<8x1xf32>
    %21 = vector.broadcast %20 : vector<8x1xf32> to vector<8x8xf32>
    %22 = arith.mulf %13, %21 : vector<8x8xf32>
    %cst_12 = arith.constant dense<0.000000e+00> : vector<8x32xf32>
    %23 = tpu.matmul %22, %5, %cst_12 {dimension_numbers = #tpu.dot_dimension_numbers<[1], [0], [0], [1], [0, 0, 1, 1], [], []>} : vector<8x8xf32>, vector<8x32xf32>, vector<8x32xf32> -> vector<8x32xf32>
    %cst_13 = arith.constant dense<0.000000e+00> : vector<8x32xf32>
    %24 = tpu.matmul %22, %23, %cst_13 {dimension_numbers = #tpu.dot_dimension_numbers<[0], [0], [1], [1], [0, 1, 1, 1], [], []>} : vector<8x8xf32>, vector<8x32xf32>, vector<8x32xf32> -> vector<8x32xf32>
    %c0_i32 = arith.constant 0 : i32
    %25 = arith.cmpi eq, %arg1, %c0_i32 : i32
    %26 = arith.extui %25 : i1 to i32
    %c0_i32_14 = arith.constant 0 : i32
    %27 = arith.cmpi ne, %26, %c0_i32_14 : i32
    scf.if %27 {
      %c0_22 = arith.constant 0 : index
      %c0_23 = arith.constant 0 : index
      %37 = vector.load %arg7[%c0_22, %c0_23] : memref<8x32xf32, #tpu.memory_space<vmem>>, vector<8x32xf32>
      tpu.vector_store %arg7[%c0_22, %c0_23], %24 {strides = array<i32>} : memref<8x32xf32, #tpu.memory_space<vmem>>, vector<8x32xf32>,
    } else {
    }
    %c0_i32_15 = arith.constant 0 : i32
    %28 = arith.cmpi ne, %arg1, %c0_i32_15 : i32
    %29 = arith.extui %28 : i1 to i32
    %c0_i32_16 = arith.constant 0 : i32
    %30 = arith.cmpi ne, %29, %c0_i32_16 : i32
    scf.if %30 {
      %c0_22 = arith.constant 0 : index
      %c0_23 = arith.constant 0 : index
      %37 = vector.load %arg7[%c0_22, %c0_23] : memref<8x32xf32, #tpu.memory_space<vmem>>, vector<8x32xf32>
      %38 = arith.addf %37, %24 : vector<8x32xf32>
      %c0_24 = arith.constant 0 : index
      %c0_25 = arith.constant 0 : index
      %39 = vector.load %arg7[%c0_24, %c0_25] : memref<8x32xf32, #tpu.memory_space<vmem>>, vector<8x32xf32>
      tpu.vector_store %arg7[%c0_24, %c0_25], %38 {strides = array<i32>} : memref<8x32xf32, #tpu.memory_space<vmem>>, vector<8x32xf32>,
    } else {
    }
    %c0_17 = arith.constant 0 : index
    %c0_18 = arith.constant 0 : index
    %c0_19 = arith.constant 0 : index
    %31 = vector.load %arg6[%c0_17, %c0_18, %c0_19] : memref<1x8x8xf32, #tpu.memory_space<vmem>>, vector<1x8x8xf32>
    %32 = vector.shape_cast %31 : vector<1x8x8xf32> to vector<8x8xf32>
    %33 = vector.shape_cast %22 : vector<8x8xf32> to vector<1x8x8xf32>
    tpu.vector_store %arg6[%c0_17, %c0_18, %c0_19], %33 {strides = array<i32>} : memref<1x8x8xf32, #tpu.memory_space<vmem>>, vector<1x8x8xf32>,
    %c0_i32_20 = arith.constant 0 : i32
    %34 = arith.cmpi eq, %arg1, %c0_i32_20 : i32
    %35 = arith.extui %34 : i1 to i32
    %c0_i32_21 = arith.constant 0 : i32
    %36 = arith.cmpi ne, %35, %c0_i32_21 : i32
    scf.if %36 {
      %c0_22 = arith.constant 0 : index
      %c0_23 = arith.constant 0 : index
      %37 = vector.load %arg7[%c0_22, %c0_23] : memref<8x32xf32, #tpu.memory_space<vmem>>, vector<8x32xf32>
      %c0_24 = arith.constant 0 : index
      %c0_25 = arith.constant 0 : index
      %c0_26 = arith.constant 0 : index
      %38 = vector.load %arg5[%c0_24, %c0_25, %c0_26] : memref<1x8x32xf32, #tpu.memory_space<vmem>>, vector<1x8x32xf32>
      %39 = vector.shape_cast %38 : vector<1x8x32xf32> to vector<8x32xf32>
      %40 = vector.shape_cast %37 : vector<8x32xf32> to vector<1x8x32xf32>
      tpu.vector_store %arg5[%c0_24, %c0_25, %c0_26], %40 {strides = array<i32>} : memref<1x8x32xf32, #tpu.memory_space<vmem>>, vector<1x8x32xf32>,
    } else {
    }
    return
  }
  func.func @transform_0(%arg0: i32, %arg1: i32) -> (i32, i32, i32) {
    %c0_i32 = arith.constant 0 : i32
    %c0_i32_0 = arith.constant 0 : i32
    return %arg0, %arg1, %c0_i32 : i32, i32, i32
  }
  func.func @transform_1(%arg0: i32, %arg1: i32) -> (i32, i32, i32) {
    %c0_i32 = arith.constant 0 : i32
    %c0_i32_0 = arith.constant 0 : i32
    %c0_i32_1 = arith.constant 0 : i32
    return %arg0, %c0_i32, %c0_i32_0 : i32, i32, i32
  }
  func.func @transform_2(%arg0: i32, %arg1: i32) -> (i32, i32, i32) {
    %c0_i32 = arith.constant 0 : i32
    %c0_i32_0 = arith.constant 0 : i32
    %c0_i32_1 = arith.constant 0 : i32
    return %arg0, %c0_i32, %c0_i32_0 : i32, i32, i32
  }
  func.func @transform_3(%arg0: i32, %arg1: i32) -> (i32, i32, i32) {
    %c0_i32 = arith.constant 0 : i32
    %c0_i32_0 = arith.constant 0 : i32
    %c0_i32_1 = arith.constant 0 : i32
    return %arg0, %c0_i32, %c0_i32_0 : i32, i32, i32
  }
  func.func @transform_4(%arg0: i32, %arg1: i32) -> (i32, i32, i32) {
    %c0_i32 = arith.constant 0 : i32
    %c0_i32_0 = arith.constant 0 : i32
    return %arg0, %arg1, %c0_i32 : i32, i32, i32
  }
}

</mosaic_0001>

<llo_original>
// kernel: tpu_custom_call.1
$region0: #{tpu_custom_call.1}
  #allocation0 [shape = 'u32[]', space=smem, size = 0x4, offset = 0x4, fixed_abs, tag = 'smem constant byte address 0x4 - core index']
  #allocation1 [shape = 'u32[72,128]{1,0:T(1,128)}', space=vmem, size = 0x9000, scoped, tag = 'internal scratch']
  #allocation2 [shape = 'f32[8,32]{1,0:T(8,128)}', space=vmem, size = 0x1000, scoped, tag = 'scratch operand']
  %s0 = inlined_call_operand.hbm [shape: f32[2,8,32], index: 0, kind: input, shape index: {}]
  %s1 = inlined_call_operand.hbm [shape: f32[2,8,32], index: 1, kind: input, shape index: {}]
  %s2 = inlined_call_operand.hbm [shape: f32[2,8,32], index: 2, kind: input, shape index: {}]
  %s3 = inlined_call_operand.hbm [shape: f32[2,8,32], index: 3, kind: output, shape index: {0}]
  %s4 = inlined_call_operand.hbm [shape: f32[2,8,8], index: 4, kind: output, shape index: {1}]
  %5 = xla_tuple %s3, %s4
  %s6 = sld [smem:[#allocation0]]
  $region77: #{tpu_custom_call.1} parent=0
    _
  %s8 = ssub.s32 1, %s6
  %s9 = scalar_select 0, %s8, %s6
  $region1: #{tpu_custom_call.1} parent=0
    #allocation3 [shape = 'u8[8192]{0}', space=vmem, size = 0x2000, scoped, tag = 'input window, operand 0']
    #allocation4 [shape = 's32[2]{0}', space=sflag, size = 0x8, scoped, tag = 'scoped memory for tpu_custom_call.1']
    #allocation5 [shape = 's32[2]{0}', space=sflag, size = 0x8, scoped, tag = 'scoped memory for tpu_custom_call.1']
    #allocation6 [shape = 'u8[8192]{0}', space=vmem, size = 0x2000, scoped, tag = 'input window, operand 1']
    #allocation7 [shape = 's32[2]{0}', space=sflag, size = 0x8, scoped, tag = 'scoped memory for tpu_custom_call.1']
    #allocation8 [shape = 'u8[8192]{0}', space=vmem, size = 0x2000, scoped, tag = 'input window, operand 2']
    #allocation9 [shape = 'u8[8192]{0}', space=vmem, size = 0x2000, scoped, tag = 'output window, operand 0']
    #allocation10 [shape = 'u8[8192]{0}', space=vmem, size = 0x2000, scoped, tag = 'output window, operand 1']
    #allocation11 [shape = 's32[2]{0}', space=sflag, size = 0x8, scoped, tag = 'scoped memory for tpu_custom_call.1']
    %10 = vsyncpa [#allocation4], 0
    %s11 = scalar_lea.sflag [#allocation4], 1
    %12 = vsyncpa %s11, 0
    %13 = vsyncpa [#allocation7], 0
    %s14 = scalar_lea.sflag [#allocation7], 1
    %15 = vsyncpa %s14, 0
    %16 = vsyncpa [#allocation5], 0
    %s17 = scalar_lea.sflag [#allocation5], 1
    %18 = vsyncpa %s17, 0
    %19 = vsyncpa [#allocation11], 0
    %s20 = scalar_lea.sflag [#allocation11], 1
    %21 = vsyncpa %s20, 0
    loop: start=0, step=1, limit=4
    $region2: #{tpu_custom_call.1} parent=1 // loop_pre_header
      _
    $region3: #{tpu_custom_call.1} parent=1 // loop_header
      %s23 = sphi 0, %s27
      %p24 = scmp.ge.s32.totalorder %s23, 4
      %s30 = sphi 0, %s42
      %s31 = sphi 0, %s38
      %s32 = sphi 0, %s30
      %s33 = sphi 0, %s31
      %s34 = sphi 0, %s32
      %s35 = sphi 0, %s33
      %s47 = sphi 0, %s49
      %s50 = sphi 0, %s47
      %s51 = sphi 0, %s50
      %s67 = sphi 0, %s51
      %s73 = sphi 0, %s75
      %s76 = sphi 0, %s73
      %s77 = sphi 0, %s76
      %s93 = sphi 0, %s77
      %s99 = sphi 0, %s101
      %s102 = sphi 0, %s99
      %s103 = sphi 0, %s102
      %s119 = sphi 0, %s103
      %s125 = sphi 0, %s127
      %s128 = sphi 0, %s125
      %s129 = sphi 0, %s128
      %s145 = sphi 0, %s129
      %s153 = sphi 0, %s155
      %s156 = sphi 0, %s153
      %s157 = sphi 0, %s156
      %s173 = sphi 0, %s157
    $region4: #{tpu_custom_call.1} parent=1 // loop_header_branch
      %26 = sbr.rel (%p24) target = $region8
    $region5: #{tpu_custom_call.1} parent=1 // loop_body
      %s28 = ssub.s32 %s23, 1
      %s29 = ssub.s32 %s23, 2
      %s36 = sadd.s32 1, %s31
      %p37 = scmp.ge.s32.totalorder %s36, 1
      %s38 = scalar_select %p37, 0, %s36
      %s39 = sadd.s32 1, %s30
      %s40 = scalar_select %p37, %s39, %s30
      %p41 = scmp.ge.s32.totalorder %s40, 2
      %s42 = scalar_select %p41, 0, %s40
      %s43 = ssub.s32 %s30, %s42
      %s44 = ssub.s32 %s31, %s38
      %s45 = sor.u32 %s43, %s44
      %p46 = scmp.eq.s32.totalorder %s45, 0
      %s48 = sadd.s32 %s47, 1
      %s49 = scalar_select %p46, %s47, %s48
      %p52 = pneg %p46
      %p53 = scmp.eq.s32.totalorder %s23, 1
      %p54 = por %p52, %p53
      %p55 = scmp.ne.s32.totalorder %s47, %s50
      %p56 = scmp.eq.s32.totalorder %s23, 0
      %p57 = por %p55, %p56
      %p58 = scmp.ne.s32.totalorder %s47, %s50
      %p59 = scmp.eq.s32.totalorder %s28, 1
      %p60 = por %p58, %p59
      %p61 = scmp.ne.s32.totalorder %s50, %s51
      %p62 = scmp.eq.s32.totalorder %s28, 0
      %p63 = por %p61, %p62
      %p64 = scmp.ne.s32.totalorder %s50, %s51
      %p65 = scmp.eq.s32.totalorder %s29, 1
      %p66 = por %p64, %p65
      %p68 = scmp.ne.s32.totalorder %s51, %s67
      %p69 = scmp.eq.s32.totalorder %s29, 0
      %p70 = por %p68, %p69
      %s71 = ssub.s32 %s30, %s42
      %p72 = scmp.eq.s32.totalorder %s71, 0
      %s74 = sadd.s32 %s73, 1
      %s75 = scalar_select %p72, %s73, %s74
      %p78 = pneg %p72
      %p79 = scmp.eq.s32.totalorder %s23, 1
      %p80 = por %p78, %p79
      %p81 = scmp.ne.s32.totalorder %s73, %s76
      %p82 = scmp.eq.s32.totalorder %s23, 0
      %p83 = por %p81, %p82
      %p84 = scmp.ne.s32.totalorder %s73, %s76
      %p85 = scmp.eq.s32.totalorder %s28, 1
      %p86 = por %p84, %p85
      %p87 = scmp.ne.s32.totalorder %s76, %s77
      %p88 = scmp.eq.s32.totalorder %s28, 0
      %p89 = por %p87, %p88
      %p90 = scmp.ne.s32.totalorder %s76, %s77
      %p91 = scmp.eq.s32.totalorder %s29, 1
      %p92 = por %p90, %p91
      %p94 = scmp.ne.s32.totalorder %s77, %s93
      %p95 = scmp.eq.s32.totalorder %s29, 0
      %p96 = por %p94, %p95
      %s97 = ssub.s32 %s30, %s42
      %p98 = scmp.eq.s32.totalorder %s97, 0
      %s100 = sadd.s32 %s99, 1
      %s101 = scalar_select %p98, %s99, %s100
      %p104 = pneg %p98
      %p105 = scmp.eq.s32.totalorder %s23, 1
      %p106 = por %p104, %p105
      %p107 = scmp.ne.s32.totalorder %s99, %s102
      %p108 = scmp.eq.s32.totalorder %s23, 0
      %p109 = por %p107, %p108
      %p110 = scmp.ne.s32.totalorder %s99, %s102
      %p111 = scmp.eq.s32.totalorder %s28, 1
      %p112 = por %p110, %p111
      %p113 = scmp.ne.s32.totalorder %s102, %s103
      %p114 = scmp.eq.s32.totalorder %s28, 0
      %p115 = por %p113, %p114
      %p116 = scmp.ne.s32.totalorder %s102, %s103
      %p117 = scmp.eq.s32.totalorder %s29, 1
      %p118 = por %p116, %p117
      %p120 = scmp.ne.s32.totalorder %s103, %s119
      %p121 = scmp.eq.s32.totalorder %s29, 0
      %p122 = por %p120, %p121
      %s123 = ssub.s32 %s30, %s42
      %p124 = scmp.eq.s32.totalorder %s123, 0
      %s126 = sadd.s32 %s125, 1
      %s127 = scalar_select %p124, %s125, %s126
      %p130 = pneg %p124
      %p131 = scmp.eq.s32.totalorder %s23, 1
      %p132 = por %p130, %p131
      %p133 = scmp.ne.s32.totalorder %s125, %s128
      %p134 = scmp.eq.s32.totalorder %s23, 0
      %p135 = por %p133, %p134
      %p136 = scmp.ne.s32.totalorder %s125, %s128
      %p137 = scmp.eq.s32.totalorder %s28, 1
      %p138 = por %p136, %p137
      %p139 = scmp.ne.s32.totalorder %s128, %s129
      %p140 = scmp.eq.s32.totalorder %s28, 0
      %p141 = por %p139, %p140
      %p142 = scmp.ne.s32.totalorder %s128, %s129
      %p143 = scmp.eq.s32.totalorder %s29, 1
      %p144 = por %p142, %p143
      %p146 = scmp.ne.s32.totalorder %s129, %s145
      %p147 = scmp.eq.s32.totalorder %s29, 0
      %p148 = por %p146, %p147
      %s149 = ssub.s32 %s30, %s42
      %s150 = ssub.s32 %s31, %s38
      %s151 = sor.u32 %s149, %s150
      %p152 = scmp.eq.s32.totalorder %s151, 0
      %s154 = sadd.s32 %s153, 1
      %s155 = scalar_select %p152, %s153, %s154
      %p158 = pneg %p152
      %p159 = scmp.eq.s32.totalorder %s23, 1
      %p160 = por %p158, %p159
      %p161 = scmp.ne.s32.totalorder %s153, %s156
      %p162 = scmp.eq.s32.totalorder %s23, 0
      %p163 = por %p161, %p162
      %p164 = scmp.ne.s32.totalorder %s153, %s156
      %p165 = scmp.eq.s32.totalorder %s28, 1
      %p166 = por %p164, %p165
      %p167 = scmp.ne.s32.totalorder %s156, %s157
      %p168 = scmp.eq.s32.totalorder %s28, 0
      %p169 = por %p167, %p168
      %p170 = scmp.ne.s32.totalorder %s156, %s157
      %p171 = scmp.eq.s32.totalorder %s29, 1
      %p172 = por %p170, %p171
      %p174 = scmp.ne.s32.totalorder %s157, %s173
      %p175 = scmp.eq.s32.totalorder %s29, 0
      %p176 = por %p174, %p175
      %p177 = scmp.le.s32.totalorder 1, %s23
      %p178 = scmp.lt.s32.totalorder %s23, 3
      %p179 = pnand %p177, %p178
      %p180 = pneg %p179
      // Predicated region
      $region9: #{tpu_custom_call.1} parent=5 // pred_check
        _
      $region10: #{tpu_custom_call.1} parent=5 // pred_check_branch
        %182 = sbr.rel (%p179) target = $region12
      $region11: #{tpu_custom_call.1} parent=5 // pred_region
        %s183 = ssub.s32 %s23, 1
      $region12: #{tpu_custom_call.1} parent=5 // pred_fallthru
        _
      %p184 = scmp.lt.s32.totalorder %s23, 2
      // Predicated region
      $region13: #{tpu_custom_call.1} parent=5 // pred_check
        %p185 = pneg %p184
      $region14: #{tpu_custom_call.1} parent=5 // pred_check_branch
        %187 = sbr.rel (%p185) target = $region16
      $region15: #{tpu_custom_call.1} parent=5 // pred_region
        // Predicated region
        $region17: #{tpu_custom_call.1} parent=15 // pred_check
          %p188 = pneg %p57
        $region18: #{tpu_custom_call.1} parent=15 // pred_check_branch
          %190 = sbr.rel (%p188) target = $region20
        $region19: #{tpu_custom_call.1} parent=15 // pred_region
          %s191 = sand.u32 %s47, 1
          %s192 = scalar_lea.sflag [#allocation4], %s191
          %s193 = sand.u32 %s47, 1
          %s194 = smul.addr %s193, 8
          %s195 = scalar_lea.vmem [#allocation3], %s194
          %197 = vsyncadd %s192, 0
          %s198 = sadd.s32 %s31, %s30
          %s199 = smul.addr %s198, 8
          %s200 = scalar_lea.hbm %s0, %s199
          %s202 = sshll.u32 %s200, 4
          %s203 = int_to_ptr.hbm [resolvable:$true] %s202
          %s204 = sshll.u32 %s195, 4
          %s205 = int_to_ptr.vmem [resolvable:$true] %s204
          %207 = dma.hbm_to_vmem [thread:$0]  %s203, 128, %s205, %s192
        $region20: #{tpu_custom_call.1} parent=15 // pred_fallthru
          _
        // Predicated region
        $region21: #{tpu_custom_call.1} parent=15 // pred_check
          %p208 = pneg %p83
        $region22: #{tpu_custom_call.1} parent=15 // pred_check_branch
          %210 = sbr.rel (%p208) target = $region24
        $region23: #{tpu_custom_call.1} parent=15 // pred_region
          %s211 = sand.u32 %s23, 1
          %s212 = scalar_lea.sflag [#allocation7], %s211
          %s213 = sand.u32 %s73, 1
          %s214 = smul.addr %s213, 8
          %s215 = scalar_lea.vmem [#allocation6], %s214
          %217 = vsyncadd %s212, 0
          %s218 = smul.addr %s30, 8
          %s219 = scalar_lea.hbm %s1, %s218
          %s221 = sshll.u32 %s219, 4
          %s222 = int_to_ptr.hbm [resolvable:$true] %s221
          %s223 = sshll.u32 %s215, 4
          %s224 = int_to_ptr.vmem [resolvable:$true] %s223
          %226 = dma.hbm_to_vmem [thread:$0]  %s222, 128, %s224, %s212
        $region24: #{tpu_custom_call.1} parent=15 // pred_fallthru
          _
        // Predicated region
        $region25: #{tpu_custom_call.1} parent=15 // pred_check
          %p227 = pneg %p109
        $region26: #{tpu_custom_call.1} parent=15 // pred_check_branch
          %229 = sbr.rel (%p227) target = $region28
        $region27: #{tpu_custom_call.1} parent=15 // pred_region
          %s230 = sand.u32 %s23, 1
          %s231 = scalar_lea.sflag [#allocation7], %s230
          %s232 = sand.u32 %s99, 1
          %s233 = smul.addr %s232, 8
          %s234 = scalar_lea.vmem [#allocation8], %s233
          %236 = vsyncadd %s231, 0
          %s237 = smul.addr %s30, 8
          %s238 = scalar_lea.hbm %s2, %s237
          %s240 = sshll.u32 %s238, 4
          %s241 = int_to_ptr.hbm [resolvable:$true] %s240
          %s242 = sshll.u32 %s234, 4
          %s243 = int_to_ptr.vmem [resolvable:$true] %s242
          %245 = dma.hbm_to_vmem [thread:$0]  %s241, 128, %s243, %s231
        $region28: #{tpu_custom_call.1} parent=15 // pred_fallthru
          _
      $region16: #{tpu_custom_call.1} parent=5 // pred_fallthru
        _
      %p246 = scmp.le.s32.totalorder 1, %s23
      %p247 = scmp.lt.s32.totalorder %s23, 3
      %p248 = pnand %p246, %p247
      %p249 = pneg %p248
      // Predicated region
      $region29: #{tpu_custom_call.1} parent=5 // pred_check
        _
      $region30: #{tpu_custom_call.1} parent=5 // pred_check_branch
        %251 = sbr.rel (%p248) target = $region32
      $region31: #{tpu_custom_call.1} parent=5 // pred_region
        %s252 = ssub.s32 %s23, 1
        %s253 = sand.u32 %s50, 1
        %s254 = scalar_lea.sflag [#allocation4], %s253
        %s255 = sand.u32 %s50, 1
        %s256 = smul.addr %s255, 8
        %s257 = scalar_lea.vmem [#allocation3], %s256
        // Predicated region
        $region33: #{tpu_custom_call.1} parent=31 // pred_check
          %p258 = pneg %p63
        $region34: #{tpu_custom_call.1} parent=31 // pred_check_branch
          %260 = sbr.rel (%p258) target = $region36
        $region35: #{tpu_custom_call.1} parent=31 // pred_region
          %262 = dma.done %s254, 128
        $region36: #{tpu_custom_call.1} parent=31 // pred_fallthru
          _
        %s263 = sand.u32 %s28, 1
        %s264 = scalar_lea.sflag [#allocation7], %s263
        %s265 = sand.u32 %s76, 1
        %s266 = smul.addr %s265, 8
        %s267 = scalar_lea.vmem [#allocation6], %s266
        // Predicated region
        $region37: #{tpu_custom_call.1} parent=31 // pred_check
          %p268 = pneg %p89
        $region38: #{tpu_custom_call.1} parent=31 // pred_check_branch
          %270 = sbr.rel (%p268) target = $region40
        $region39: #{tpu_custom_call.1} parent=31 // pred_region
          %272 = dma.done %s264, 128
        $region40: #{tpu_custom_call.1} parent=31 // pred_fallthru
          _
        %s273 = sand.u32 %s28, 1
        %s274 = scalar_lea.sflag [#allocation7], %s273
        %s275 = sand.u32 %s102, 1
        %s276 = smul.addr %s275, 8
        %s277 = scalar_lea.vmem [#allocation8], %s276
        // Predicated region
        $region41: #{tpu_custom_call.1} parent=31 // pred_check
          %p278 = pneg %p115
        $region42: #{tpu_custom_call.1} parent=31 // pred_check_branch
          %280 = sbr.rel (%p278) target = $region44
        $region43: #{tpu_custom_call.1} parent=31 // pred_region
          %282 = dma.done %s274, 128
        $region44: #{tpu_custom_call.1} parent=31 // pred_fallthru
          _
        %s283 = sand.u32 %s50, 1
        %s284 = scalar_lea.sflag [#allocation4], %s283
        %s285 = sand.u32 %s50, 1
        %s286 = smul.addr %s285, 8
        %s287 = scalar_lea.vmem [#allocation3], %s286
        %p288 = pneg %p63
        %p289 = pneg %p60
        %s290 = sand.u32 %s28, 1
        %s291 = scalar_lea.sflag [#allocation7], %s290
        %s292 = sand.u32 %s76, 1
        %s293 = smul.addr %s292, 8
        %s294 = scalar_lea.vmem [#allocation6], %s293
        %p295 = pneg %p89
        %p296 = pneg %p86
        %s297 = sand.u32 %s28, 1
        %s298 = scalar_lea.sflag [#allocation7], %s297
        %s299 = sand.u32 %s102, 1
        %s300 = smul.addr %s299, 8
        %s301 = scalar_lea.vmem [#allocation8], %s300
        %p302 = pneg %p115
        %p303 = pneg %p112
        %p304 = pneg %p141
        %p305 = pneg %p138
        %s306 = sand.u32 %s128, 1
        %s307 = scalar_lea.sflag [#allocation5], %s306
        %s308 = sand.u32 %s128, 1
        %s309 = smul.addr %s308, 8
        %s310 = scalar_lea.vmem [#allocation9], %s309
        %p311 = pneg %p169
        %p312 = pneg %p166
        %s313 = sand.u32 %s156, 1
        %s314 = scalar_lea.sflag [#allocation11], %s313
        %s315 = sand.u32 %s156, 1
        %s316 = smul.addr %s315, 8
        %s317 = scalar_lea.vmem [#allocation10], %s316
        %v318 = vld [vmem:[%s257] sm:$0xff]
        %v319 = vmul.f32 %v318, 0.17677669
        %v320 = vld [vmem:[%s277] sm:$0xff]
        %v321 = vld [vmem:[%s267] sm:$0xff]
        %vm322 = vcmask 261120
        %v324 = vsel %vm322, %v319, 0
        %v327 = vsel %vm322, %v321, 0
        %329 = vmatpush.xpose.msra.mxu0 0.0
        %330 = vmatpush.xpose.msra.mxu0 0.0
        %331 = vmatpush.xpose.msra.mxu0 0.0
        %332 = vmatpush.xpose.msra.mxu0 0.0
        %333 = vmatpush.xpose.msra.mxu0 0.0
        %334 = vmatpush.xpose.msra.mxu0 0.0
        %335 = vmatpush.xpose.msra.mxu0 0.0
        %336 = vmatpush.xpose.msra.mxu0 0.0
        %337 = vmatpush.xpose.msra.mxu0 0.0
        %338 = vmatpush.xpose.msra.mxu0 0.0
        %339 = vmatpush.xpose.msra.mxu0 0.0
        %340 = vmatpush.xpose.msra.mxu0 0.0
        %341 = vmatpush.xpose.msra.mxu0 0.0
        %342 = vmatpush.xpose.msra.mxu0 0.0
        %343 = vmatpush.xpose.msra.mxu0 0.0
        %344 = vmatpush.xpose.msra.mxu0 %v327
        %345 = vmatmul.f32.gmra.mxu0 %v324
        %v346 = vpop.f32.mrf.mxu0
        %v347 = vadd.f32 0.0, %v346
        %348 = vdwg.mxu0
        %vm349 = vcmask 64512
        %v350 = vsel %vm349, %v347, -inf
        %351 = vmax.xlane.f32.xlu0 %v350
        %v352 = vpop.xlane.xlu0 %351
        %v353 = vsub.f32 %v347, %v352
        %v354 = vmul.f32 %v353, 1.442695
        %v355 = vpow.pop %v354
        %v356 = vsel %vm349, %v355, 0.0
        %357 = vadd.xlane.f32.xlu0 %v356
        %v358 = vpop.xlane.xlu0 %357
        %v359 = vrcp.pop %v358
        %v360 = vmul.f32 %v358, %v359
        %v361 = vsub.f32 2.0, %v360
        %v362 = vmul.f32 %v359, %v361
        %v363 = vmul.f32 %v355, %v362
        %v365 = vsel %vm349, %v363, 0
        %367 = vmatpush.msra.mxu0 0.0
        %368 = vmatpush.msra.mxu0 0.0
        %369 = vmatpush.msra.mxu0 0.0
        %370 = vmatpush.msra.mxu0 0.0
        %371 = vmatpush.msra.mxu0 0.0
        %372 = vmatpush.msra.mxu0 0.0
        %373 = vmatpush.msra.mxu0 0.0
        %374 = vmatpush.msra.mxu0 0.0
        %375 = vmatpush.msra.mxu0 0.0
        %376 = vmatpush.msra.mxu0 0.0
        %377 = vmatpush.msra.mxu0 0.0
        %378 = vmatpush.msra.mxu0 0.0
        %379 = vmatpush.msra.mxu0 0.0
        %380 = vmatpush.msra.mxu0 0.0
        %381 = vmatpush.msra.mxu0 0.0
        %382 = vmatpush.msra.mxu0 %v320
        %383 = vmatmul.f32.gmra.mxu0 %v365
        %v384 = vpop.f32.mrf.mxu0
        %v385 = vadd.f32 0.0, %v384
        %386 = vdwg.mxu0
        %387 = vxpose.xlu0.b32.start [1/16] %v363, 128
        %388 = vxpose.xlu0.b32.cont [2/16] 0.0, 128
        %389 = vxpose.xlu0.b32.cont [3/16] 0.0, 128
        %390 = vxpose.xlu0.b32.cont [4/16] 0.0, 128
        %391 = vxpose.xlu0.b32.cont [5/16] 0.0, 128
        %392 = vxpose.xlu0.b32.cont [6/16] 0.0, 128
        %393 = vxpose.xlu0.b32.cont [7/16] 0.0, 128
        %394 = vxpose.xlu0.b32.cont [8/16] 0.0, 128
        %395 = vxpose.xlu0.b32.cont [9/16] 0.0, 128
        %396 = vxpose.xlu0.b32.cont [10/16] 0.0, 128
        %397 = vxpose.xlu0.b32.cont [11/16] 0.0, 128
        %398 = vxpose.xlu0.b32.cont [12/16] 0.0, 128
        %399 = vxpose.xlu0.b32.cont [13/16] 0.0, 128
        %400 = vxpose.xlu0.b32.cont [14/16] 0.0, 128
        %401 = vxpose.xlu0.b32.cont [15/16] 0.0, 128
        %402 = vxpose.xlu0.b32.end [16/16] 0.0, 128
        %v403 = vpop.trf.xlu0
        %v404 = vpop.trf.xlu0
        %v405 = vpop.trf.xlu0
        %v406 = vpop.trf.xlu0
        %v407 = vpop.trf.xlu0
        %v408 = vpop.trf.xlu0
        %v409 = vpop.trf.xlu0
        %v410 = vpop.trf.xlu0
        %v411 = vpop.trf.xlu0
        %v412 = vpop.trf.xlu0
        %v413 = vpop.trf.xlu0
        %v414 = vpop.trf.xlu0
        %v415 = vpop.trf.xlu0
        %v416 = vpop.trf.xlu0
        %v417 = vpop.trf.xlu0
        %v418 = vpop.trf.xlu0
        %v420 = vsel %vm349, %v403, 0
        %422 = vmatpush.msra.mxu0 0.0
        %423 = vmatpush.msra.mxu0 0.0
        %424 = vmatpush.msra.mxu0 0.0
        %425 = vmatpush.msra.mxu0 0.0
        %426 = vmatpush.msra.mxu0 0.0
        %427 = vmatpush.msra.mxu0 0.0
        %428 = vmatpush.msra.mxu0 0.0
        %429 = vmatpush.msra.mxu0 0.0
        %430 = vmatpush.msra.mxu0 0.0
        %431 = vmatpush.msra.mxu0 0.0
        %432 = vmatpush.msra.mxu0 0.0
        %433 = vmatpush.msra.mxu0 0.0
        %434 = vmatpush.msra.mxu0 0.0
        %435 = vmatpush.msra.mxu0 0.0
        %436 = vmatpush.msra.mxu0 0.0
        %437 = vmatpush.msra.mxu0 %v385
        %438 = vmatmul.f32.gmra.mxu0 %v420
        %v439 = vpop.f32.mrf.mxu0
        %v440 = vadd.f32 0.0, %v439
        %441 = vdwg.mxu0
        %p442 = scmp.eq.s32.totalorder %s33, 0
        // Predicated region
        $region45: #{tpu_custom_call.1} parent=31 // pred_check
          %p443 = pneg %p442
        $region46: #{tpu_custom_call.1} parent=31 // pred_check_branch
          %445 = sbr.rel (%p443) target = $region48
        $region47: #{tpu_custom_call.1} parent=31 // pred_region
          %446 = vst.msk [vmem:[#allocation2] sm:$0xff] %vm322, %v440
        $region48: #{tpu_custom_call.1} parent=31 // pred_fallthru
          _
        %p447 = scmp.ne.s32.totalorder %s33, 0
        // Predicated region
        $region49: #{tpu_custom_call.1} parent=31 // pred_check
          %p448 = pneg %p447
        $region50: #{tpu_custom_call.1} parent=31 // pred_check_branch
          %450 = sbr.rel (%p448) target = $region52
        $region51: #{tpu_custom_call.1} parent=31 // pred_region
          %v451 = vld [vmem:[#allocation2] sm:$0xff]
          %v452 = vadd.f32 %v451, %v440
          %453 = vst.msk [vmem:[#allocation2] sm:$0xff] %vm322, %v452
        $region52: #{tpu_custom_call.1} parent=31 // pred_fallthru
          _
        %454 = vst.msk [vmem:[%s317] sm:$0xff] %vm349, %v363
        // Predicated region
        $region53: #{tpu_custom_call.1} parent=31 // pred_check
          %p455 = pneg %p442
        $region54: #{tpu_custom_call.1} parent=31 // pred_check_branch
          %457 = sbr.rel (%p455) target = $region56
        $region55: #{tpu_custom_call.1} parent=31 // pred_region
          %v458 = vld [vmem:[#allocation2] sm:$0xff]
          %459 = vst.msk [vmem:[%s310] sm:$0xff] %vm322, %v458
        $region56: #{tpu_custom_call.1} parent=31 // pred_fallthru
          _
        %s460 = sand.u32 %s128, 1
        %s461 = scalar_lea.sflag [#allocation5], %s460
        %s462 = sand.u32 %s128, 1
        %s463 = smul.addr %s462, 8
        %s464 = scalar_lea.vmem [#allocation9], %s463
        %s465 = sand.u32 %s156, 1
        %s466 = scalar_lea.sflag [#allocation11], %s465
        %s467 = sand.u32 %s156, 1
        %s468 = smul.addr %s467, 8
        %s469 = scalar_lea.vmem [#allocation10], %s468
        // Predicated region
        $region57: #{tpu_custom_call.1} parent=31 // pred_check
          %p470 = pneg %p138
        $region58: #{tpu_custom_call.1} parent=31 // pred_check_branch
          %472 = sbr.rel (%p470) target = $region60
        $region59: #{tpu_custom_call.1} parent=31 // pred_region
          %474 = vsyncadd %s461, 0
          %s475 = smul.addr %s32, 8
          %s476 = scalar_lea.hbm %s3, %s475
          %s478 = sshll.u32 %s464, 4
          %s479 = int_to_ptr.vmem [resolvable:$true] %s478
          %s480 = sshll.u32 %s476, 4
          %s481 = int_to_ptr.hbm [resolvable:$true] %s480
          %483 = dma.vmem_to_hbm [thread:$0]  %s479, 128, %s481, %s461
        $region60: #{tpu_custom_call.1} parent=31 // pred_fallthru
          _
        // Predicated region
        $region61: #{tpu_custom_call.1} parent=31 // pred_check
          %p484 = pneg %p166
        $region62: #{tpu_custom_call.1} parent=31 // pred_check_branch
          %486 = sbr.rel (%p484) target = $region64
        $region63: #{tpu_custom_call.1} parent=31 // pred_region
          %488 = vsyncadd %s466, 0
          %s489 = sadd.s32 %s33, %s32
          %s490 = smul.addr %s489, 8
          %s491 = scalar_lea.hbm %s4, %s490
          %s493 = sshll.u32 %s469, 4
          %s494 = int_to_ptr.vmem [resolvable:$true] %s493
          %s495 = sshll.u32 %s491, 4
          %s496 = int_to_ptr.hbm [resolvable:$true] %s495
          %498 = dma.vmem_to_hbm [thread:$0]  %s494, 128, %s496, %s466
        $region64: #{tpu_custom_call.1} parent=31 // pred_fallthru
          _
      $region32: #{tpu_custom_call.1} parent=5 // pred_fallthru
        _
      %p499 = scmp.le.s32.totalorder 2, %s23
      // Predicated region
      $region65: #{tpu_custom_call.1} parent=5 // pred_check
        %p500 = pneg %p499
      $region66: #{tpu_custom_call.1} parent=5 // pred_check_branch
        %502 = sbr.rel (%p500) target = $region68
      $region67: #{tpu_custom_call.1} parent=5 // pred_region
        %s503 = ssub.s32 %s23, 2
        // Predicated region
        $region69: #{tpu_custom_call.1} parent=67 // pred_check
          %p504 = pneg %p144
        $region70: #{tpu_custom_call.1} parent=67 // pred_check_branch
          %506 = sbr.rel (%p504) target = $region72
        $region71: #{tpu_custom_call.1} parent=67 // pred_region
          %s507 = sand.u32 %s129, 1
          %s508 = scalar_lea.sflag [#allocation5], %s507
          %s509 = sand.u32 %s129, 1
          %s510 = smul.addr %s509, 8
          %s511 = scalar_lea.vmem [#allocation9], %s510
          %513 = dma.done %s508, 128
        $region72: #{tpu_custom_call.1} parent=67 // pred_fallthru
          _
        // Predicated region
        $region73: #{tpu_custom_call.1} parent=67 // pred_check
          %p514 = pneg %p172
        $region74: #{tpu_custom_call.1} parent=67 // pred_check_branch
          %516 = sbr.rel (%p514) target = $region76
        $region75: #{tpu_custom_call.1} parent=67 // pred_region
          %s517 = sand.u32 %s157, 1
          %s518 = scalar_lea.sflag [#allocation11], %s517
          %s519 = sand.u32 %s157, 1
          %s520 = smul.addr %s519, 8
          %s521 = scalar_lea.vmem [#allocation10], %s520
          %523 = dma.done %s518, 128
        $region76: #{tpu_custom_call.1} parent=67 // pred_fallthru
          _
      $region68: #{tpu_custom_call.1} parent=5 // pred_fallthru
        _
    $region6: #{tpu_custom_call.1} parent=1 // loop_footer
      %s27 = sadd.s32 1, %s23
    $region7: #{tpu_custom_call.1} parent=1 // loop_footer_branch
      %22 = sbr.rel target = $region3
    $region8: #{tpu_custom_call.1} parent=1 // loop_exit
      _
    %524 = vsyncpa [#allocation4], 1
    %s525 = scalar_lea.sflag [#allocation4], 1
    %526 = vsyncpa %s525, 1
    %527 = vsyncpa [#allocation7], 1
    %s528 = scalar_lea.sflag [#allocation7], 1
    %529 = vsyncpa %s528, 1
    %530 = vsyncpa [#allocation5], 1
    %s531 = scalar_lea.sflag [#allocation5], 1
    %532 = vsyncpa %s531, 1
    %533 = vsyncpa [#allocation11], 1
    %s534 = scalar_lea.sflag [#allocation11], 1
    %535 = vsyncpa %s534, 1

</llo_original>
